<compile_context>
chip_gen: v6e
topology: v6e:2x2x1
jax: 0.10.0
libtpu: 0.0.40
codegen_flags: <defaults>
</compile_context>

<pallas_src>
import jax
import jax.numpy as jnp
from jax.experimental import pallas as pl
from jax.experimental.pallas import tpu as pltpu


def _round_up(x, m):
    return (x + m - 1) // m * m


# ---------------- stage 1: fused projection X @ [W | W_root] ----------------
def proj_kernel(x_ref, w_ref, xwn_ref, xwr_ref):
    # One MXU matmul: (tm, c_in_pad) @ (c_in_pad, 2*c_pad) -> f32 accumulate.
    xw = jnp.dot(x_ref[...], w_ref[...], preferred_element_type=jnp.float32)
    c = xwn_ref.shape[-1]
    # Neighbor projection: stored bf16 (feeds the next MXU stage, halves HBM).
    xwn_ref[...] = xw[:, :c].astype(xwn_ref.dtype)
    # Root projection: stored f32 (added in the f32 epilogue of stage 2).
    xwr_ref[...] = xw[:, c:]


# ------------- stage 2: A @ (X W) accumulated over K, + root + bias ---------
def agg_kernel(a_ref, xwn_ref, xwr_ref, b_ref, o_ref, acc_ref):
    k = pl.program_id(1)

    @pl.when(k == 0)
    def _():
        acc_ref[...] = jnp.zeros_like(acc_ref)

    # (tm, tk) bf16 @ (tk, c_pad) bf16 -> f32 accumulator (MXU).
    acc_ref[...] += jnp.dot(a_ref[...], xwn_ref[...],
                            preferred_element_type=jnp.float32)

    @pl.when(k == pl.num_programs(1) - 1)
    def _():
        # f32 epilogue: root term + bias, lane-dense (c_pad multiple of 128).
        o_ref[...] = acc_ref[...] + xwr_ref[...] + b_ref[...]


def sage_conv(adj_norm, x, weight, root_weight, bias, *, tm=None, tk=None):
    n, c_in = x.shape
    c_out = weight.shape[1]
    f32, bf16 = jnp.float32, jnp.bfloat16

    # ---- padded, MXU/lane-aligned shapes (all multiples of 128) ----
    n_pad = _round_up(n, 128)
    tk = tk or min(512, n_pad)          # K tile of A (last, "arbitrary" axis)
    tm = tm or min(256, n_pad)          # row tile ("parallel" axis)
    n_pad = _round_up(n_pad, max(tm, tk))
    c_in_pad = _round_up(c_in, 128)
    c_pad = _round_up(c_out, 128)

    # ---- pad + cast inputs (zero padding keeps the math exact) ----
    a_p = jnp.pad(adj_norm.astype(bf16), ((0, n_pad - n), (0, n_pad - n)))
    x_p = jnp.pad(x.astype(bf16), ((0, n_pad - n), (0, c_in_pad - c_in)))
    w_p = jnp.pad(weight.astype(bf16),
                  ((0, c_in_pad - c_in), (0, c_pad - c_out)))
    wr_p = jnp.pad(root_weight.astype(bf16),
                   ((0, c_in_pad - c_in), (0, c_pad - c_out)))
    w_cat = jnp.concatenate([w_p, wr_p], axis=1)          # (c_in_pad, 2*c_pad)
    b_p = jnp.pad(bias.astype(f32), (0, c_pad - c_out)).reshape(1, c_pad)

    n_row = n_pad // tm
    n_col = n_pad // tk
    vmem_limit = 32 * 1024 * 1024

    # -------------------- stage 1 pallas_call --------------------
    xw_n, xw_r = pl.pallas_call(
        proj_kernel,
        out_shape=(jax.ShapeDtypeStruct((n_pad, c_pad), bf16),
                   jax.ShapeDtypeStruct((n_pad, c_pad), f32)),
        grid_spec=pltpu.PrefetchScalarGridSpec(
            num_scalar_prefetch=0,
            grid=(n_row,),
            in_specs=[
                pl.BlockSpec((tm, c_in_pad), lambda i: (i, 0)),
                pl.BlockSpec((c_in_pad, 2 * c_pad), lambda i: (0, 0)),
            ],
            out_specs=(pl.BlockSpec((tm, c_pad), lambda i: (i, 0)),
                       pl.BlockSpec((tm, c_pad), lambda i: (i, 0))),
        ),
        compiler_params=pltpu.CompilerParams(
            dimension_semantics=("parallel",),
            vmem_limit_bytes=vmem_limit),
        cost_estimate=pl.CostEstimate(
            flops=2 * n_pad * c_in_pad * 2 * c_pad,
            transcendentals=0,
            bytes_accessed=(n_pad * c_in_pad * 2 + c_in_pad * 2 * c_pad * 2
                            + n_pad * c_pad * 2 + n_pad * c_pad * 4)),
    )(x_p, w_cat)

    # -------------------- stage 2 pallas_call --------------------
    out_p = pl.pallas_call(
        agg_kernel,
        out_shape=jax.ShapeDtypeStruct((n_pad, c_pad), f32),
        grid_spec=pltpu.PrefetchScalarGridSpec(
            num_scalar_prefetch=0,
            grid=(n_row, n_col),
            in_specs=[
                pl.BlockSpec((tm, tk), lambda i, k: (i, k)),       # A tile
                pl.BlockSpec((tk, c_pad), lambda i, k: (k, 0)),    # X@W tile
                pl.BlockSpec((tm, c_pad), lambda i, k: (i, 0)),    # X@W_root
                pl.BlockSpec((1, c_pad), lambda i, k: (0, 0)),     # bias
            ],
            out_specs=pl.BlockSpec((tm, c_pad), lambda i, k: (i, 0)),
            scratch_shapes=[pltpu.VMEM((tm, c_pad), f32)],
        ),
        compiler_params=pltpu.CompilerParams(
            dimension_semantics=("parallel", "arbitrary"),
            vmem_limit_bytes=vmem_limit),
        cost_estimate=pl.CostEstimate(
            flops=2 * n_pad * n_pad * c_pad,
            transcendentals=0,
            bytes_accessed=(n_pad * n_pad * 2 + n_row * n_pad * c_pad * 2
                            + n_pad * c_pad * 4 + c_pad * 4
                            + n_pad * c_pad * 4)),
    )(a_p, xw_n, xw_r, b_p)

    return out_p[:n, :c_out]


def glorot(key, shape):
    fan_in, fan_out = shape
    limit = jnp.sqrt(6.0 / (fan_in + fan_out))
    return jax.random.uniform(key, shape, jnp.float32, -limit, limit)


if __name__ == "__main__":
    key = jax.random.PRNGKey(0)
    k_x, k_e, k_w, k_wr = jax.random.split(key, 4)

    N = 128          # number of nodes
    C_IN = 64        # in_channels
    C_OUT = 32       # out_channels
    N_EDGES = 512

    # Node features
    x = jax.random.normal(k_x, (N, C_IN), dtype=jnp.float32)

    # Deterministic synthetic edge_index -> dense row-normalized adjacency
    # (mean aggregation over incoming columns, matching
    #  SparseTensor(row, col).matmul(x, reduce='mean')).
    edge_index = jax.random.randint(k_e, (2, N_EDGES), 0, N)
    adj = jnp.zeros((N, N), jnp.float32).at[edge_index[0], edge_index[1]].set(1.0)
    deg = adj.sum(axis=1, keepdims=True)
    adj_norm = jnp.where(deg > 0, adj / jnp.maximum(deg, 1.0), 0.0)

    # Parameters (glorot weights, zero bias) -- deterministic in-script init.
    weight = glorot(k_w, (C_IN, C_OUT))
    root_weight = glorot(k_wr, (C_IN, C_OUT))
    bias = jnp.zeros((C_OUT,), jnp.float32)

    out = sage_conv(adj_norm, x, weight, root_weight, bias)
    out = jax.block_until_ready(out)
    assert out.shape == (N, C_OUT)

    # Reference 1: bf16-quantized inputs (matches kernel's MXU dtype path).
    f32, bf16 = jnp.float32, jnp.bfloat16
    adj_bf = adj_norm.astype(bf16).astype(f32)
    x_bf = x.astype(bf16).astype(f32)
    w_bf = weight.astype(bf16).astype(f32)
    wr_bf = root_weight.astype(bf16).astype(f32)
    xw_n_ref = (x_bf @ w_bf).astype(bf16).astype(f32)
    ref_match = adj_bf @ xw_n_ref + x_bf @ wr_bf + bias
    assert jnp.allclose(out, ref_match, atol=2e-3, rtol=2e-3), (
        float(jnp.max(jnp.abs(out - ref_match))))

    # Reference 2: full f32 math (loose tolerance for bf16 MXU inputs).
    ref_f32 = adj_norm @ x @ weight + x @ root_weight + bias
    assert jnp.allclose(out, ref_f32, atol=5e-2, rtol=5e-2), (
        float(jnp.max(jnp.abs(out - ref_f32))))

    print("KERNEL_OK")
</pallas_src>

<mosaic_0001>
module attributes {stable_mosaic.version = 11 : i64} {
  func.func @proj_kernel(%arg0: i32, %arg1: memref<128x128xbf16, #tpu.memory_space<vmem>>, %arg2: memref<128x256xbf16, #tpu.memory_space<vmem>>, %arg3: memref<128x128xbf16, #tpu.memory_space<vmem>>, %arg4: memref<128x128xf32, #tpu.memory_space<vmem>>) attributes {dimension_semantics = [#tpu.dimension_semantics<parallel>], iteration_bounds = array<i64: 1>, scalar_prefetch = 0 : i64, scratch_operands = 0 : i64, tpu.core_type = #tpu.core_type<tc>, window_params = [{transform_indices = @transform_0, window_bounds = array<i64: 128, 128>}, {pipeline_mode = #tpu.pipeline_mode<synchronous>, transform_indices = @transform_1, window_bounds = array<i64: 128, 256>}, {transform_indices = @transform_2, window_bounds = array<i64: 128, 128>}, {transform_indices = @transform_3, window_bounds = array<i64: 128, 128>}]} {
    %c0 = arith.constant 0 : index
    %c0_0 = arith.constant 0 : index
    %0 = vector.load %arg1[%c0, %c0_0] : memref<128x128xbf16, #tpu.memory_space<vmem>>, vector<128x128xbf16>
    %c0_1 = arith.constant 0 : index
    %c0_2 = arith.constant 0 : index
    %1 = vector.load %arg2[%c0_1, %c0_2] : memref<128x256xbf16, #tpu.memory_space<vmem>>, vector<128x256xbf16>
    %cst = arith.constant dense<0.000000e+00> : vector<128x256xf32>
    %2 = tpu.matmul %0, %1, %cst {dimension_numbers = #tpu.dot_dimension_numbers<[1], [0], [0], [1], [0, 0, 1, 1], [], []>} : vector<128x128xbf16>, vector<128x256xbf16>, vector<128x256xf32> -> vector<128x256xf32>
    %3 = vector.extract_strided_slice %2 {offsets = [0, 0], sizes = [128, 128], strides = [1, 1]} : vector<128x256xf32> to vector<128x128xf32>
    %4 = arith.truncf %3 : vector<128x128xf32> to vector<128x128xbf16>
    %c0_3 = arith.constant 0 : index
    %c0_4 = arith.constant 0 : index
    %5 = vector.load %arg3[%c0_3, %c0_4] : memref<128x128xbf16, #tpu.memory_space<vmem>>, vector<128x128xbf16>
    tpu.vector_store %arg3[%c0_3, %c0_4], %4 {strides = array<i32>} : memref<128x128xbf16, #tpu.memory_space<vmem>>, vector<128x128xbf16>,
    %6 = vector.extract_strided_slice %2 {offsets = [0, 128], sizes = [128, 128], strides = [1, 1]} : vector<128x256xf32> to vector<128x128xf32>
    %c0_5 = arith.constant 0 : index
    %c0_6 = arith.constant 0 : index
    %7 = vector.load %arg4[%c0_5, %c0_6] : memref<128x128xf32, #tpu.memory_space<vmem>>, vector<128x128xf32>
    tpu.vector_store %arg4[%c0_5, %c0_6], %6 {strides = array<i32>} : memref<128x128xf32, #tpu.memory_space<vmem>>, vector<128x128xf32>,
    return
  }
  func.func @transform_0(%arg0: i32) -> (i32, i32) {
    %c0_i32 = arith.constant 0 : i32
    %c0_i32_0 = arith.constant 0 : i32
    return %arg0, %c0_i32 : i32, i32
  }
  func.func @transform_1(%arg0: i32) -> (i32, i32) {
    %c0_i32 = arith.constant 0 : i32
    %c0_i32_0 = arith.constant 0 : i32
    %c0_i32_1 = arith.constant 0 : i32
    return %c0_i32, %c0_i32_0 : i32, i32
  }
  func.func @transform_2(%arg0: i32) -> (i32, i32) {
    %c0_i32 = arith.constant 0 : i32
    %c0_i32_0 = arith.constant 0 : i32
    return %arg0, %c0_i32 : i32, i32
  }
  func.func @transform_3(%arg0: i32) -> (i32, i32) {
    %c0_i32 = arith.constant 0 : i32
    %c0_i32_0 = arith.constant 0 : i32
    return %arg0, %c0_i32 : i32, i32
  }
}

</mosaic_0001>

<llo_original>
// kernel: tpu_custom_call.1
$region0: #{tpu_custom_call.1}
  #allocation0 [shape = 'u32[]', space=smem, size = 0x4, offset = 0x4, fixed_abs, tag = 'smem constant byte address 0x4 - core index']
  #allocation1 [shape = 'u32[144,128]{1,0:T(1,128)}', space=vmem, size = 0x12000, scoped, tag = 'internal scratch']
  %s0 = inlined_call_operand.hbm [shape: bf16[128,128], index: 0, kind: input, shape index: {}]
  %s1 = inlined_call_operand.hbm [shape: bf16[128,256], index: 1, kind: input, shape index: {}]
  %s2 = inlined_call_operand.hbm [shape: bf16[128,128], index: 2, kind: output, shape index: {0}]
  %s3 = inlined_call_operand.hbm [shape: f32[128,128], index: 3, kind: output, shape index: {1}]
  %4 = xla_tuple %s2, %s3
  %s5 = sld [smem:[#allocation0]]
  $region34: #{tpu_custom_call.1} parent=0
    _
  %s7 = ssub.s32 1, %s5
  %s8 = scalar_select 0, %s7, %s5
  $region1: #{tpu_custom_call.1} parent=0
    #allocation2 [shape = 'u8[32768]{0}', space=vmem, size = 0x8000, scoped, tag = 'input window, operand 0, single buffered']
    #allocation3 [shape = 's32[1]{0}', space=sflag, size = 0x4, scoped, tag = 'scoped memory for tpu_custom_call.1']
    #allocation4 [shape = 's32[1]{0}', space=sflag, size = 0x4, scoped, tag = 'scoped memory for tpu_custom_call.1']
    #allocation5 [shape = 'u8[65536]{0}', space=vmem, size = 0x10000, scoped, tag = 'input window, operand 1, single buffered']
    #allocation6 [shape = 's32[1]{0}', space=sflag, size = 0x4, scoped, tag = 'scoped memory for tpu_custom_call.1']
    #allocation7 [shape = 'u8[32768]{0}', space=vmem, size = 0x8000, scoped, tag = 'output window, operand 0, single buffered']
    #allocation8 [shape = 'u8[65536]{0}', space=vmem, size = 0x10000, scoped, tag = 'output window, operand 1, single buffered']
    #allocation9 [shape = 's32[1]{0}', space=sflag, size = 0x4, scoped, tag = 'scoped memory for tpu_custom_call.1']
    %9 = vsyncpa [#allocation3], 0
    %10 = vsyncpa [#allocation6], 0
    %11 = vsyncpa [#allocation4], 0
    %12 = vsyncpa [#allocation9], 0
    // Predicated region
    $region2: #{tpu_custom_call.1} parent=1 // pred_check
      _
    $region3: #{tpu_custom_call.1} parent=1 // pred_check_branch
      %14 = sbr.rel (0) target = $region5
    $region4: #{tpu_custom_call.1} parent=1 // pred_region
      %s16 = ssub.s32 1024, 1024
      %17 = vsyncadd [#allocation3], %s16
      %s18 = sshll.u32 [#allocation2], 4
      %s19 = int_to_ptr.vmem [resolvable:$true] %s18
      %24 = dma.hbm_to_vmem [thread:$0]  %s0, 1024, %s19, [#allocation3], 64, 64, 4
    $region5: #{tpu_custom_call.1} parent=1 // pred_fallthru
      _
    // Predicated region
    $region6: #{tpu_custom_call.1} parent=1 // pred_check
      _
    $region7: #{tpu_custom_call.1} parent=1 // pred_check_branch
      %26 = sbr.rel (0) target = $region9
    $region8: #{tpu_custom_call.1} parent=1 // pred_region
      %s28 = ssub.s32 2048, 2048
      %29 = vsyncadd [#allocation6], %s28
      %s30 = sshll.u32 [#allocation5], 4
      %s31 = int_to_ptr.vmem [resolvable:$true] %s30
      %36 = dma.hbm_to_vmem [thread:$0]  %s1, 2048, %s31, [#allocation6], 128, 128, 8
    $region9: #{tpu_custom_call.1} parent=1 // pred_fallthru
      _
    // Predicated region
    $region10: #{tpu_custom_call.1} parent=1 // pred_check
      _
    $region11: #{tpu_custom_call.1} parent=1 // pred_check_branch
      %38 = sbr.rel (0) target = $region13
    $region12: #{tpu_custom_call.1} parent=1 // pred_region
      %39 = dma.done [#allocation3], 1024
    $region13: #{tpu_custom_call.1} parent=1 // pred_fallthru
      _
    // Predicated region
    $region14: #{tpu_custom_call.1} parent=1 // pred_check
      _
    $region15: #{tpu_custom_call.1} parent=1 // pred_check_branch
      %41 = sbr.rel (0) target = $region17
    $region16: #{tpu_custom_call.1} parent=1 // pred_region
      %42 = dma.done [#allocation6], 2048
    $region17: #{tpu_custom_call.1} parent=1 // pred_fallthru
      _
    %v44 = vld [vmem:[#allocation2] sm:$0xf]
    %v45 = vld [vmem:[#allocation2 + $0x4] sm:$0xf]
    %v46 = vld [vmem:[#allocation2 + $0x8] sm:$0xf]
    %v47 = vld [vmem:[#allocation2 + $0xc] sm:$0xf]
    %v48 = vld [vmem:[#allocation2 + $0x10] sm:$0xf]
    %v49 = vld [vmem:[#allocation2 + $0x14] sm:$0xf]
    %v50 = vld [vmem:[#allocation2 + $0x18] sm:$0xf]
    %v51 = vld [vmem:[#allocation2 + $0x1c] sm:$0xf]
    %v52 = vld [vmem:[#allocation2 + $0x20] sm:$0xf]
    %v53 = vld [vmem:[#allocation2 + $0x24] sm:$0xf]
    %v54 = vld [vmem:[#allocation2 + $0x28] sm:$0xf]
    %v55 = vld [vmem:[#allocation2 + $0x2c] sm:$0xf]
    %v56 = vld [vmem:[#allocation2 + $0x30] sm:$0xf]
    %v57 = vld [vmem:[#allocation2 + $0x34] sm:$0xf]
    %v58 = vld [vmem:[#allocation2 + $0x38] sm:$0xf]
    %v59 = vld [vmem:[#allocation2 + $0x3c] sm:$0xf]
    %v60 = vld [vmem:[#allocation5] sm:$0xff]
    %v61 = vld [vmem:[#allocation5 + $0x8] sm:$0xff]
    %v62 = vld [vmem:[#allocation5 + $0x10] sm:$0xff]
    %v63 = vld [vmem:[#allocation5 + $0x18] sm:$0xff]
    %v64 = vld [vmem:[#allocation5 + $0x20] sm:$0xff]
    %v65 = vld [vmem:[#allocation5 + $0x28] sm:$0xff]
    %v66 = vld [vmem:[#allocation5 + $0x30] sm:$0xff]
    %v67 = vld [vmem:[#allocation5 + $0x38] sm:$0xff]
    %v68 = vld [vmem:[#allocation5 + $0x40] sm:$0xff]
    %v69 = vld [vmem:[#allocation5 + $0x48] sm:$0xff]
    %v70 = vld [vmem:[#allocation5 + $0x50] sm:$0xff]
    %v71 = vld [vmem:[#allocation5 + $0x58] sm:$0xff]
    %v72 = vld [vmem:[#allocation5 + $0x60] sm:$0xff]
    %v73 = vld [vmem:[#allocation5 + $0x68] sm:$0xff]
    %v74 = vld [vmem:[#allocation5 + $0x70] sm:$0xff]
    %v75 = vld [vmem:[#allocation5 + $0x78] sm:$0xff]
    %v92 = vunpack.c.l.b16 %v44
    %v93 = vunpack.c.l.b16 %v45
    %v94 = vunpack.c.l.b16 %v46
    %v95 = vunpack.c.l.b16 %v47
    %v96 = vunpack.c.l.b16 %v48
    %v97 = vunpack.c.l.b16 %v49
    %v98 = vunpack.c.l.b16 %v50
    %v99 = vunpack.c.l.b16 %v51
    %v100 = vunpack.c.l.b16 %v52
    %v101 = vunpack.c.l.b16 %v53
    %v102 = vunpack.c.l.b16 %v54
    %v103 = vunpack.c.l.b16 %v55
    %v104 = vunpack.c.l.b16 %v56
    %v105 = vunpack.c.l.b16 %v57
    %v106 = vunpack.c.l.b16 %v58
    %v107 = vunpack.c.l.b16 %v59
    %v108 = vpack.c.b16 %v93, %v92
    %v109 = vpack.c.b16 %v95, %v94
    %v110 = vpack.c.b16 %v97, %v96
    %v111 = vpack.c.b16 %v99, %v98
    %v112 = vpack.c.b16 %v101, %v100
    %v113 = vpack.c.b16 %v103, %v102
    %v114 = vpack.c.b16 %v105, %v104
    %v115 = vpack.c.b16 %v107, %v106
    %v140 = vunpack.c.l.b16 %v60
    %v141 = vunpack.c.h.b16 %v60
    %v142 = vunpack.c.l.b16 %v61
    %v143 = vunpack.c.h.b16 %v61
    %v144 = vunpack.c.l.b16 %v62
    %v145 = vunpack.c.h.b16 %v62
    %v146 = vunpack.c.l.b16 %v63
    %v147 = vunpack.c.h.b16 %v63
    %v148 = vunpack.c.l.b16 %v64
    %v149 = vunpack.c.h.b16 %v64
    %v150 = vunpack.c.l.b16 %v65
    %v151 = vunpack.c.h.b16 %v65
    %v152 = vunpack.c.l.b16 %v66
    %v153 = vunpack.c.h.b16 %v66
    %v154 = vunpack.c.l.b16 %v67
    %v155 = vunpack.c.h.b16 %v67
    %v156 = vunpack.c.l.b16 %v68
    %v157 = vunpack.c.h.b16 %v68
    %v158 = vunpack.c.l.b16 %v69
    %v159 = vunpack.c.h.b16 %v69
    %v160 = vunpack.c.l.b16 %v70
    %v161 = vunpack.c.h.b16 %v70
    %v162 = vunpack.c.l.b16 %v71
    %v163 = vunpack.c.h.b16 %v71
    %v164 = vunpack.c.l.b16 %v72
    %v165 = vunpack.c.h.b16 %v72
    %v166 = vunpack.c.l.b16 %v73
    %v167 = vunpack.c.h.b16 %v73
    %v168 = vunpack.c.l.b16 %v74
    %v169 = vunpack.c.h.b16 %v74
    %v170 = vunpack.c.l.b16 %v75
    %v171 = vunpack.c.h.b16 %v75
    %v172 = vpack.c.b16 %v142, %v140
    %v173 = vpack.c.b16 %v143, %v141
    %v174 = vpack.c.b16 %v146, %v144
    %v175 = vpack.c.b16 %v147, %v145
    %v176 = vpack.c.b16 %v150, %v148
    %v177 = vpack.c.b16 %v151, %v149
    %v178 = vpack.c.b16 %v154, %v152
    %v179 = vpack.c.b16 %v155, %v153
    %v180 = vpack.c.b16 %v158, %v156
    %v181 = vpack.c.b16 %v159, %v157
    %v182 = vpack.c.b16 %v162, %v160
    %v183 = vpack.c.b16 %v163, %v161
    %v184 = vpack.c.b16 %v166, %v164
    %v185 = vpack.c.b16 %v167, %v165
    %v186 = vpack.c.b16 %v170, %v168
    %v187 = vpack.c.b16 %v171, %v169
    %204 = vmatprep.subr.bf16.mxu0 %v187
    %205 = vmatpush1.bf16.msra.mxu0 %v186
    %206 = vmatprep.subr.bf16.mxu0 %v185
    %207 = vmatpush1.bf16.msra.mxu0 %v184
    %208 = vmatprep.subr.bf16.mxu0 %v183
    %209 = vmatpush1.bf16.msra.mxu0 %v182
    %210 = vmatprep.subr.bf16.mxu0 %v181
    %211 = vmatpush1.bf16.msra.mxu0 %v180
    %212 = vmatprep.subr.bf16.mxu0 %v179
    %213 = vmatpush1.bf16.msra.mxu0 %v178
    %214 = vmatprep.subr.bf16.mxu0 %v177
    %215 = vmatpush1.bf16.msra.mxu0 %v176
    %216 = vmatprep.subr.bf16.mxu0 %v175
    %217 = vmatpush1.bf16.msra.mxu0 %v174
    %218 = vmatprep.subr.bf16.mxu0 %v173
    %219 = vmatpush1.bf16.msra.mxu0 %v172
    %220 = vmatprep.subr.bf16.mxu0 0
    %221 = vmatpush2.bf16.msra.mxu0 0
    %222 = vmatprep.subr.bf16.mxu0 0
    %223 = vmatpush2.bf16.msra.mxu0 0
    %224 = vmatprep.subr.bf16.mxu0 0
    %225 = vmatpush2.bf16.msra.mxu0 0
    %226 = vmatprep.subr.bf16.mxu0 0
    %227 = vmatpush2.bf16.msra.mxu0 0
    %228 = vmatprep.subr.bf16.mxu0 0
    %229 = vmatpush2.bf16.msra.mxu0 0
    %230 = vmatprep.subr.bf16.mxu0 0
    %231 = vmatpush2.bf16.msra.mxu0 0
    %232 = vmatprep.subr.bf16.mxu0 0
    %233 = vmatpush2.bf16.msra.mxu0 0
    %234 = vmatprep.subr.bf16.mxu0 0
    %235 = vmatpush2.bf16.msra.mxu0 0
    %236 = vmatprep.mubr.bf16.mxu0 0
    %237 = vmatmul.mubr.bf16.gmra.mxu0 %v108
    %v238 = vpop.f32.mrf.mxu0
    %v239 = vadd.f32 0.0, %v238
    %v240 = vpop.f32.mrf.mxu0
    %v241 = vadd.f32 0.0, %v240
    %v242 = vpop.f32.mrf.mxu0
    %v243 = vadd.f32 0.0, %v242
    %v244 = vpop.f32.mrf.mxu0
    %v245 = vadd.f32 0.0, %v244
    %246 = vmatprep.mubr.bf16.mxu0 0
    %247 = vmatmul.mubr.bf16.gmra.mxu0 %v109
    %v248 = vpop.f32.mrf.mxu0
    %v249 = vadd.f32 0.0, %v248
    %v250 = vpop.f32.mrf.mxu0
    %v251 = vadd.f32 0.0, %v250
    %v252 = vpop.f32.mrf.mxu0
    %v253 = vadd.f32 0.0, %v252
    %v254 = vpop.f32.mrf.mxu0
    %v255 = vadd.f32 0.0, %v254
    %256 = vmatprep.mubr.bf16.mxu0 0
    %257 = vmatmul.mubr.bf16.gmra.mxu0 %v110
    %v258 = vpop.f32.mrf.mxu0
    %v259 = vadd.f32 0.0, %v258
    %v260 = vpop.f32.mrf.mxu0
    %v261 = vadd.f32 0.0, %v260
    %v262 = vpop.f32.mrf.mxu0
    %v263 = vadd.f32 0.0, %v262
    %v264 = vpop.f32.mrf.mxu0
    %v265 = vadd.f32 0.0, %v264
    %266 = vmatprep.mubr.bf16.mxu0 0
    %267 = vmatmul.mubr.bf16.gmra.mxu0 %v111
    %v268 = vpop.f32.mrf.mxu0
    %v269 = vadd.f32 0.0, %v268
    %v270 = vpop.f32.mrf.mxu0
    %v271 = vadd.f32 0.0, %v270
    %v272 = vpop.f32.mrf.mxu0
    %v273 = vadd.f32 0.0, %v272
    %v274 = vpop.f32.mrf.mxu0
    %v275 = vadd.f32 0.0, %v274
    %276 = vmatprep.mubr.bf16.mxu0 0
    %277 = vmatmul.mubr.bf16.gmra.mxu0 %v112
    %v278 = vpop.f32.mrf.mxu0
    %v279 = vadd.f32 0.0, %v278
    %v280 = vpop.f32.mrf.mxu0
    %v281 = vadd.f32 0.0, %v280
    %v282 = vpop.f32.mrf.mxu0
    %v283 = vadd.f32 0.0, %v282
    %v284 = vpop.f32.mrf.mxu0
    %v285 = vadd.f32 0.0, %v284
    %286 = vmatprep.mubr.bf16.mxu0 0
    %287 = vmatmul.mubr.bf16.gmra.mxu0 %v113
    %v288 = vpop.f32.mrf.mxu0
    %v289 = vadd.f32 0.0, %v288
    %v290 = vpop.f32.mrf.mxu0
    %v291 = vadd.f32 0.0, %v290
    %v292 = vpop.f32.mrf.mxu0
    %v293 = vadd.f32 0.0, %v292
    %v294 = vpop.f32.mrf.mxu0
    %v295 = vadd.f32 0.0, %v294
    %296 = vmatprep.mubr.bf16.mxu0 0
    %297 = vmatmul.mubr.bf16.gmra.mxu0 %v114
    %v298 = vpop.f32.mrf.mxu0
    %v299 = vadd.f32 0.0, %v298
    %v300 = vpop.f32.mrf.mxu0
    %v301 = vadd.f32 0.0, %v300
    %v302 = vpop.f32.mrf.mxu0
    %v303 = vadd.f32 0.0, %v302
    %v304 = vpop.f32.mrf.mxu0
    %v305 = vadd.f32 0.0, %v304
    %306 = vmatprep.mubr.bf16.mxu0 0
    %307 = vmatmul.mubr.bf16.gmra.mxu0 %v115
    %v308 = vpop.f32.mrf.mxu0
    %v309 = vadd.f32 0.0, %v308
    %v310 = vpop.f32.mrf.mxu0
    %v311 = vadd.f32 0.0, %v310
    %v312 = vpop.f32.mrf.mxu0
    %v313 = vadd.f32 0.0, %v312
    %v314 = vpop.f32.mrf.mxu0
    %v315 = vadd.f32 0.0, %v314
    %316 = vdwg.mxu0
    %v317 = vpack.c.bf16 %v243, %v239
    %v318 = vpack.c.bf16 %v253, %v249
    %v319 = vpack.c.bf16 %v263, %v259
    %v320 = vpack.c.bf16 %v273, %v269
    %v321 = vpack.c.bf16 %v283, %v279
    %v322 = vpack.c.bf16 %v293, %v289
    %v323 = vpack.c.bf16 %v303, %v299
    %v324 = vpack.c.bf16 %v313, %v309
    %v333 = vunpack.c.l.b16 %v317
    %v334 = vunpack.c.h.b16 %v317
    %v335 = vunpack.c.l.b16 %v318
    %v336 = vunpack.c.h.b16 %v318
    %v337 = vunpack.c.l.b16 %v319
    %v338 = vunpack.c.h.b16 %v319
    %v339 = vunpack.c.l.b16 %v320
    %v340 = vunpack.c.h.b16 %v320
    %v341 = vunpack.c.l.b16 %v321
    %v342 = vunpack.c.h.b16 %v321
    %v343 = vunpack.c.l.b16 %v322
    %v344 = vunpack.c.h.b16 %v322
    %v345 = vunpack.c.l.b16 %v323
    %v346 = vunpack.c.h.b16 %v323
    %v347 = vunpack.c.l.b16 %v324
    %v348 = vunpack.c.h.b16 %v324
    %v349 = vpack.c.b16 %v333, %v333
    %v350 = vpack.c.b16 %v334, %v334
    %v351 = vpack.c.b16 %v335, %v335
    %v352 = vpack.c.b16 %v336, %v336
    %v353 = vpack.c.b16 %v337, %v337
    %v354 = vpack.c.b16 %v338, %v338
    %v355 = vpack.c.b16 %v339, %v339
    %v356 = vpack.c.b16 %v340, %v340
    %v357 = vpack.c.b16 %v341, %v341
    %v358 = vpack.c.b16 %v342, %v342
    %v359 = vpack.c.b16 %v343, %v343
    %v360 = vpack.c.b16 %v344, %v344
    %v361 = vpack.c.b16 %v345, %v345
    %v362 = vpack.c.b16 %v346, %v346
    %v363 = vpack.c.b16 %v347, %v347
    %v364 = vpack.c.b16 %v348, %v348
    %381 = vst [vmem:[#allocation7] sm:$0xf] %v349
    %382 = vst [vmem:[#allocation7 + $0x4] sm:$0xf] %v350
    %383 = vst [vmem:[#allocation7 + $0x8] sm:$0xf] %v351
    %384 = vst [vmem:[#allocation7 + $0xc] sm:$0xf] %v352
    %385 = vst [vmem:[#allocation7 + $0x10] sm:$0xf] %v353
    %386 = vst [vmem:[#allocation7 + $0x14] sm:$0xf] %v354
    %387 = vst [vmem:[#allocation7 + $0x18] sm:$0xf] %v355
    %388 = vst [vmem:[#allocation7 + $0x1c] sm:$0xf] %v356
    %389 = vst [vmem:[#allocation7 + $0x20] sm:$0xf] %v357
    %390 = vst [vmem:[#allocation7 + $0x24] sm:$0xf] %v358
    %391 = vst [vmem:[#allocation7 + $0x28] sm:$0xf] %v359
    %392 = vst [vmem:[#allocation7 + $0x2c] sm:$0xf] %v360
    %393 = vst [vmem:[#allocation7 + $0x30] sm:$0xf] %v361
    %394 = vst [vmem:[#allocation7 + $0x34] sm:$0xf] %v362
    %395 = vst [vmem:[#allocation7 + $0x38] sm:$0xf] %v363
    %396 = vst [vmem:[#allocation7 + $0x3c] sm:$0xf] %v364
    %397 = vst [vmem:[#allocation8] sm:$0xff] %v241
    %398 = vst [vmem:[#allocation8 + $0x8] sm:$0xff] %v245
    %399 = vst [vmem:[#allocation8 + $0x10] sm:$0xff] %v251
    %400 = vst [vmem:[#allocation8 + $0x18] sm:$0xff] %v255
    %401 = vst [vmem:[#allocation8 + $0x20] sm:$0xff] %v261
    %402 = vst [vmem:[#allocation8 + $0x28] sm:$0xff] %v265
    %403 = vst [vmem:[#allocation8 + $0x30] sm:$0xff] %v271
    %404 = vst [vmem:[#allocation8 + $0x38] sm:$0xff] %v275
    %405 = vst [vmem:[#allocation8 + $0x40] sm:$0xff] %v281
    %406 = vst [vmem:[#allocation8 + $0x48] sm:$0xff] %v285
    %407 = vst [vmem:[#allocation8 + $0x50] sm:$0xff] %v291
    %408 = vst [vmem:[#allocation8 + $0x58] sm:$0xff] %v295
    %409 = vst [vmem:[#allocation8 + $0x60] sm:$0xff] %v301
    %410 = vst [vmem:[#allocation8 + $0x68] sm:$0xff] %v305
    %411 = vst [vmem:[#allocation8 + $0x70] sm:$0xff] %v311
    %412 = vst [vmem:[#allocation8 + $0x78] sm:$0xff] %v315
    // Predicated region
    $region18: #{tpu_custom_call.1} parent=1 // pred_check
      _
    $region19: #{tpu_custom_call.1} parent=1 // pred_check_branch
      %414 = sbr.rel (0) target = $region21
    $region20: #{tpu_custom_call.1} parent=1 // pred_region
      %s416 = ssub.s32 1024, 1024
      %417 = vsyncadd [#allocation4], %s416
      %s418 = sshll.u32 [#allocation7], 4
      %s419 = int_to_ptr.vmem [resolvable:$true] %s418
      %424 = dma.vmem_to_hbm [thread:$0]  %s419, 1024, %s2, [#allocation4], 64, 64, 4
    $region21: #{tpu_custom_call.1} parent=1 // pred_fallthru
      _
    // Predicated region
    $region22: #{tpu_custom_call.1} parent=1 // pred_check
      _
    $region23: #{tpu_custom_call.1} parent=1 // pred_check_branch
      %426 = sbr.rel (0) target = $region25
    $region24: #{tpu_custom_call.1} parent=1 // pred_region
      %s428 = ssub.s32 2048, 2048
      %429 = vsyncadd [#allocation9], %s428
      %s430 = sshll.u32 [#allocation8], 4
      %s431 = int_to_ptr.vmem [resolvable:$true] %s430
      %436 = dma.vmem_to_hbm [thread:$0]  %s431, 2048, %s3, [#allocation9], 128, 128, 8
    $region25: #{tpu_custom_call.1} parent=1 // pred_fallthru
      _
    // Predicated region
    $region26: #{tpu_custom_call.1} parent=1 // pred_check
      _
    $region27: #{tpu_custom_call.1} parent=1 // pred_check_branch
      %438 = sbr.rel (0) target = $region29
    $region28: #{tpu_custom_call.1} parent=1 // pred_region
      %439 = dma.done [#allocation4], 1024
    $region29: #{tpu_custom_call.1} parent=1 // pred_fallthru
      _
    // Predicated region
    $region30: #{tpu_custom_call.1} parent=1 // pred_check
      _
    $region31: #{tpu_custom_call.1} parent=1 // pred_check_branch
      %441 = sbr.rel (0) target = $region33
    $region32: #{tpu_custom_call.1} parent=1 // pred_region
      %442 = dma.done [#allocation9], 2048
    $region33: #{tpu_custom_call.1} parent=1 // pred_fallthru
      _
    %443 = vsyncpa [#allocation3], 1
    %444 = vsyncpa [#allocation6], 1
    %445 = vsyncpa [#allocation4], 1
    %446 = vsyncpa [#allocation9], 1

</llo_original>
